<compile_context>
chip_gen: v7x
topology: tpu7x:2x2x1
jax: 0.10.0
libtpu: 0.0.40
codegen_flags: <defaults>
</compile_context>

<pallas_src>
from functools import partial

import jax
import jax.numpy as jnp
from jax.experimental import pallas as pl
from jax.experimental.pallas import tpu as pltpu


def _sepconv_kernel(x_ref, dwp_ref, pwb_ref, o_ref, *, kh, kw, c, tile_h, wc_out):
    """One (batch, h-tile) step of depthwise(KxK) + pointwise(1x1).

    x_ref  : (1, 1, tile_h + kh - 1, W_pad * C)   packed lanes = (W, C)
    dwp_ref: (kh * kw, W_out * C)                 per-tap depthwise weights
    pwb_ref: (W_out * C, W_out * O)               block-diagonal pointwise weights
    o_ref  : (1, 1, tile_h, W_out * O)            packed lanes = (W_out, O)
    """
    # Depthwise: accumulate per-tap shifted windows, reading straight from the
    # ref (static slices on a Ref; keeps the full band from staying live).
    acc = jnp.zeros((tile_h, wc_out), jnp.float32)
    for i in range(kh):
        for j in range(kw):
            tap = i * kw + j
            win = x_ref[0, 0, i:i + tile_h, j * c:j * c + wc_out]
            acc = acc + win.astype(jnp.float32) * dwp_ref[tap:tap + 1, :].astype(jnp.float32)

    # Pointwise 1x1 conv as a single lane-dense matmul against the precomputed
    # block-diagonal weight: no reshape/relayout of `acc`, and the result row is
    # already (W_out * O) lanes wide for an unmasked store.
    pw_mat = pwb_ref[...]
    if pw_mat.dtype == jnp.bfloat16:
        out = jnp.dot(acc.astype(jnp.bfloat16), pw_mat,
                      preferred_element_type=jnp.float32)
    else:
        out = jnp.dot(acc, pw_mat.astype(jnp.float32),
                      preferred_element_type=jnp.float32)
    o_ref[0, 0] = out.astype(o_ref.dtype)


def separable_conv2d(x_nchw, dw_weight, pw_weight, *, stride=1, padding=0, tile_h=None):
    """x_nchw: (N, C, H, W); dw_weight: (C, 1, KH, KW); pw_weight: (O, C, 1, 1)."""
    n, c, h, w = x_nchw.shape
    kh, kw = int(dw_weight.shape[2]), int(dw_weight.shape[3])
    o = int(pw_weight.shape[0])

    if stride != 1:
        # Exact: the 1x1 pointwise conv commutes with spatial subsampling, so a
        # strided separable conv == stride-1 separable conv subsampled.
        # TODO(synk): a space-to-batch phase decomposition would avoid the
        # stride**2 redundant compute while keeping unit-stride in-kernel taps.
        full = separable_conv2d(x_nchw, dw_weight, pw_weight, stride=1,
                                padding=padding, tile_h=tile_h)
        return full[:, :, ::stride, ::stride]

    h_out = h + 2 * padding - kh + 1
    w_out = w + 2 * padding - kw + 1

    # ---- wrapper-side layout plumbing (plain JAX / XLA) --------------------
    # NCHW -> NHWC, zero-pad spatially, pack (W, C) onto the lane axis.
    xt = jnp.transpose(x_nchw, (0, 2, 3, 1))
    xp = jnp.pad(xt, ((0, 0), (padding, padding), (padding, padding), (0, 0)))
    h_pad, w_pad = xp.shape[1], xp.shape[2]
    x_packed = xp.reshape(n, h_pad, w_pad * c)

    # H tiling with a (kh - 1)-row halo, duplicated here so kernel blocks are
    # non-overlapping and per-step DMA / VMEM is bounded independent of H.
    if tile_h is None:
        tile_h = min(h_out, 8)   # small toy tiles; raise for large images
    n_ht = -(-h_out // tile_h)
    h_out_pad = n_ht * tile_h
    band_h = tile_h + kh - 1
    rows_needed = h_out_pad + kh - 1
    if rows_needed > h_pad:
        x_packed = jnp.pad(x_packed, ((0, 0), (0, rows_needed - h_pad), (0, 0)))
    row_idx = jnp.arange(n_ht)[:, None] * tile_h + jnp.arange(band_h)[None, :]
    x_tiles = x_packed[:, row_idx, :]                 # (N, n_ht, band_h, W_pad*C)

    # Depthwise taps, tiled across W_out so they broadcast over packed lanes.
    dw = jnp.transpose(dw_weight[:, 0, :, :], (1, 2, 0))             # (KH, KW, C)
    dwp = jnp.tile(dw.reshape(kh * kw, 1, c), (1, w_out, 1))
    dwp = dwp.reshape(kh * kw, w_out * c)

    # Pointwise 1x1 as a block-diagonal matrix acting on packed lanes:
    # pw_big[w*C + ci, v*O + co] = pw[ci, co] if w == v else 0.
    pw = jnp.transpose(pw_weight[:, :, 0, 0], (1, 0))                # (C, O)
    eye_w = jnp.eye(w_out, dtype=pw.dtype)
    pw_big = jnp.einsum('wv,co->wcvo', eye_w, pw).reshape(w_out * c, w_out * o)

    kernel = partial(_sepconv_kernel, kh=kh, kw=kw, c=c, tile_h=tile_h,
                     wc_out=w_out * c)

    itemsize = x_nchw.dtype.itemsize
    in_tile_bytes = band_h * w_pad * c * itemsize
    out_tile_bytes = tile_h * w_out * o * itemsize
    weight_bytes = int((dwp.size + pw_big.size) * dwp.dtype.itemsize)
    # Double-buffered in/out tiles + resident weights, with headroom; clamp to
    # stay well under the v7x 64 MiB physical VMEM while lifting the 16/32 MiB
    # scoped defaults when larger tiles are used.
    vmem_need = 2 * (in_tile_bytes + out_tile_bytes) + 2 * weight_bytes + (1 << 20)
    vmem_limit = int(min(max(vmem_need, 16 * 2**20), 48 * 2**20))

    cost = pl.CostEstimate(
        flops=2 * n * h_out * w_out * c * (kh * kw + o),
        transcendentals=0,
        bytes_accessed=int(x_tiles.size * itemsize
                           + n * h_out_pad * w_out * o * itemsize
                           + weight_bytes),
    )

    out_tiles = pl.pallas_call(
        kernel,
        out_shape=jax.ShapeDtypeStruct((n, n_ht, tile_h, w_out * o), x_nchw.dtype),
        grid_spec=pltpu.PrefetchScalarGridSpec(
            num_scalar_prefetch=0,
            grid=(n, n_ht),
            in_specs=[
                pl.BlockSpec((1, 1, band_h, w_pad * c), lambda b, t: (b, t, 0, 0)),
                pl.BlockSpec((kh * kw, w_out * c), lambda b, t: (0, 0)),
                pl.BlockSpec((w_out * c, w_out * o), lambda b, t: (0, 0)),
            ],
            out_specs=pl.BlockSpec((1, 1, tile_h, w_out * o),
                                   lambda b, t: (b, t, 0, 0)),
        ),
        compiler_params=pltpu.CompilerParams(
            dimension_semantics=("parallel", "parallel"),
            vmem_limit_bytes=vmem_limit),
        cost_estimate=cost,
    )(x_tiles, dwp, pw_big)

    # Unpack (N, n_ht, tile_h, W_out*O) -> NCHW and crop any H padding.
    out = out_tiles.reshape(n, h_out_pad, w_out, o)[:, :h_out]
    return jnp.transpose(out, (0, 3, 1, 2))


def _reference(x_nchw, dw_weight, pw_weight, *, stride, padding):
    y = jax.lax.conv_general_dilated(
        x_nchw, dw_weight, (stride, stride),
        [(padding, padding), (padding, padding)],
        dimension_numbers=("NCHW", "OIHW", "NCHW"),
        feature_group_count=x_nchw.shape[1])
    y = jax.lax.conv_general_dilated(
        y, pw_weight, (1, 1), [(0, 0), (0, 0)],
        dimension_numbers=("NCHW", "OIHW", "NCHW"))
    return y


if __name__ == "__main__":
    # SeparableConv2d(in_channels=4, out_channels=8, kernel_size=3,
    #                 stride=1, padding=1, bias=False)
    N, C_IN, C_OUT, H, W = 2, 4, 8, 16, 16
    K, STRIDE, PAD = 3, 1, 1

    key = jax.random.PRNGKey(0)
    kx, kdw, kpw = jax.random.split(key, 3)
    x = jax.random.normal(kx, (N, C_IN, H, W), dtype=jnp.float32)
    # PyTorch parameter shapes: depthwise (C_IN, 1, K, K), pointwise (C_OUT, C_IN, 1, 1)
    dw_weight = jax.random.normal(kdw, (C_IN, 1, K, K), dtype=jnp.float32) * 0.1
    pw_weight = jax.random.normal(kpw, (C_OUT, C_IN, 1, 1), dtype=jnp.float32) * 0.1

    out = separable_conv2d(x, dw_weight, pw_weight, stride=STRIDE, padding=PAD)
    out = jax.block_until_ready(out)
    ref = _reference(x, dw_weight, pw_weight, stride=STRIDE, padding=PAD)
    assert out.shape == (N, C_OUT, H, W), out.shape
    assert jnp.allclose(out, ref, atol=1e-5, rtol=1e-5), "mismatch vs reference (stride=1)"

    # Also exercise the stride>1 path of the module.
    out2 = separable_conv2d(x, dw_weight, pw_weight, stride=2, padding=PAD)
    out2 = jax.block_until_ready(out2)
    ref2 = _reference(x, dw_weight, pw_weight, stride=2, padding=PAD)
    assert out2.shape == ref2.shape, (out2.shape, ref2.shape)
    assert jnp.allclose(out2, ref2, atol=1e-5, rtol=1e-5), "mismatch vs reference (stride=2)"

    print("KERNEL_OK")
</pallas_src>

<mosaic_0001>
module attributes {stable_mosaic.version = 11 : i64} {
  func.func @_sepconv_kernel(%arg0: i32, %arg1: i32, %arg2: memref<1x1x10x72xf32, #tpu.memory_space<vmem>>, %arg3: memref<9x64xf32, #tpu.memory_space<vmem>>, %arg4: memref<64x128xf32, #tpu.memory_space<vmem>>, %arg5: memref<1x1x8x128xf32, #tpu.memory_space<vmem>>) attributes {dimension_semantics = [#tpu.dimension_semantics<parallel>, #tpu.dimension_semantics<parallel>], iteration_bounds = array<i64: 2, 2>, scalar_prefetch = 0 : i64, scratch_operands = 0 : i64, tpu.core_type = #tpu.core_type<tc>, window_params = [{transform_indices = @transform_0, window_bounds = array<i64: 1, 1, 10, 72>}, {pipeline_mode = #tpu.pipeline_mode<synchronous>, transform_indices = @transform_1, window_bounds = array<i64: 9, 64>}, {pipeline_mode = #tpu.pipeline_mode<synchronous>, transform_indices = @transform_2, window_bounds = array<i64: 64, 128>}, {transform_indices = @transform_3, window_bounds = array<i64: 1, 1, 8, 128>}]} {
    %cst = arith.constant 0.000000e+00 : f32
    %0 = vector.broadcast %cst : f32 to vector<8x64xf32>
    %c0 = arith.constant 0 : index
    %c0_0 = arith.constant 0 : index
    %c0_1 = arith.constant 0 : index
    %c0_2 = arith.constant 0 : index
    %1 = vector.load %arg2[%c0, %c0_0, %c0_1, %c0_2] : memref<1x1x10x72xf32, #tpu.memory_space<vmem>>, vector<1x1x8x64xf32>
    %2 = vector.shape_cast %1 : vector<1x1x8x64xf32> to vector<8x64xf32>
    %c0_3 = arith.constant 0 : index
    %c0_4 = arith.constant 0 : index
    %3 = vector.load %arg3[%c0_3, %c0_4] : memref<9x64xf32, #tpu.memory_space<vmem>>, vector<1x64xf32>
    %4 = vector.broadcast %3 : vector<1x64xf32> to vector<8x64xf32>
    %5 = arith.mulf %2, %4 : vector<8x64xf32>
    %6 = arith.addf %0, %5 : vector<8x64xf32>
    %c0_5 = arith.constant 0 : index
    %c0_6 = arith.constant 0 : index
    %c0_7 = arith.constant 0 : index
    %c4 = arith.constant 4 : index
    %7 = vector.load %arg2[%c0_5, %c0_6, %c0_7, %c4] : memref<1x1x10x72xf32, #tpu.memory_space<vmem>>, vector<1x1x8x64xf32>
    %8 = vector.shape_cast %7 : vector<1x1x8x64xf32> to vector<8x64xf32>
    %c1 = arith.constant 1 : index
    %c0_8 = arith.constant 0 : index
    %9 = vector.load %arg3[%c1, %c0_8] : memref<9x64xf32, #tpu.memory_space<vmem>>, vector<1x64xf32>
    %10 = vector.broadcast %9 : vector<1x64xf32> to vector<8x64xf32>
    %11 = arith.mulf %8, %10 : vector<8x64xf32>
    %12 = arith.addf %6, %11 : vector<8x64xf32>
    %c0_9 = arith.constant 0 : index
    %c0_10 = arith.constant 0 : index
    %c0_11 = arith.constant 0 : index
    %c8 = arith.constant 8 : index
    %13 = vector.load %arg2[%c0_9, %c0_10, %c0_11, %c8] : memref<1x1x10x72xf32, #tpu.memory_space<vmem>>, vector<1x1x8x64xf32>
    %14 = vector.shape_cast %13 : vector<1x1x8x64xf32> to vector<8x64xf32>
    %c2 = arith.constant 2 : index
    %c0_12 = arith.constant 0 : index
    %15 = vector.load %arg3[%c2, %c0_12] : memref<9x64xf32, #tpu.memory_space<vmem>>, vector<1x64xf32>
    %16 = vector.broadcast %15 : vector<1x64xf32> to vector<8x64xf32>
    %17 = arith.mulf %14, %16 : vector<8x64xf32>
    %18 = arith.addf %12, %17 : vector<8x64xf32>
    %c0_13 = arith.constant 0 : index
    %c0_14 = arith.constant 0 : index
    %c1_15 = arith.constant 1 : index
    %c0_16 = arith.constant 0 : index
    %19 = vector.load %arg2[%c0_13, %c0_14, %c1_15, %c0_16] : memref<1x1x10x72xf32, #tpu.memory_space<vmem>>, vector<1x1x8x64xf32>
    %20 = vector.shape_cast %19 : vector<1x1x8x64xf32> to vector<8x64xf32>
    %c3 = arith.constant 3 : index
    %c0_17 = arith.constant 0 : index
    %21 = vector.load %arg3[%c3, %c0_17] : memref<9x64xf32, #tpu.memory_space<vmem>>, vector<1x64xf32>
    %22 = vector.broadcast %21 : vector<1x64xf32> to vector<8x64xf32>
    %23 = arith.mulf %20, %22 : vector<8x64xf32>
    %24 = arith.addf %18, %23 : vector<8x64xf32>
    %c0_18 = arith.constant 0 : index
    %c0_19 = arith.constant 0 : index
    %c1_20 = arith.constant 1 : index
    %c4_21 = arith.constant 4 : index
    %25 = vector.load %arg2[%c0_18, %c0_19, %c1_20, %c4_21] : memref<1x1x10x72xf32, #tpu.memory_space<vmem>>, vector<1x1x8x64xf32>
    %26 = vector.shape_cast %25 : vector<1x1x8x64xf32> to vector<8x64xf32>
    %c4_22 = arith.constant 4 : index
    %c0_23 = arith.constant 0 : index
    %27 = vector.load %arg3[%c4_22, %c0_23] : memref<9x64xf32, #tpu.memory_space<vmem>>, vector<1x64xf32>
    %28 = vector.broadcast %27 : vector<1x64xf32> to vector<8x64xf32>
    %29 = arith.mulf %26, %28 : vector<8x64xf32>
    %30 = arith.addf %24, %29 : vector<8x64xf32>
    %c0_24 = arith.constant 0 : index
    %c0_25 = arith.constant 0 : index
    %c1_26 = arith.constant 1 : index
    %c8_27 = arith.constant 8 : index
    %31 = vector.load %arg2[%c0_24, %c0_25, %c1_26, %c8_27] : memref<1x1x10x72xf32, #tpu.memory_space<vmem>>, vector<1x1x8x64xf32>
    %32 = vector.shape_cast %31 : vector<1x1x8x64xf32> to vector<8x64xf32>
    %c5 = arith.constant 5 : index
    %c0_28 = arith.constant 0 : index
    %33 = vector.load %arg3[%c5, %c0_28] : memref<9x64xf32, #tpu.memory_space<vmem>>, vector<1x64xf32>
    %34 = vector.broadcast %33 : vector<1x64xf32> to vector<8x64xf32>
    %35 = arith.mulf %32, %34 : vector<8x64xf32>
    %36 = arith.addf %30, %35 : vector<8x64xf32>
    %c0_29 = arith.constant 0 : index
    %c0_30 = arith.constant 0 : index
    %c2_31 = arith.constant 2 : index
    %c0_32 = arith.constant 0 : index
    %37 = vector.load %arg2[%c0_29, %c0_30, %c2_31, %c0_32] : memref<1x1x10x72xf32, #tpu.memory_space<vmem>>, vector<1x1x8x64xf32>
    %38 = vector.shape_cast %37 : vector<1x1x8x64xf32> to vector<8x64xf32>
    %c6 = arith.constant 6 : index
    %c0_33 = arith.constant 0 : index
    %39 = vector.load %arg3[%c6, %c0_33] : memref<9x64xf32, #tpu.memory_space<vmem>>, vector<1x64xf32>
    %40 = vector.broadcast %39 : vector<1x64xf32> to vector<8x64xf32>
    %41 = arith.mulf %38, %40 : vector<8x64xf32>
    %42 = arith.addf %36, %41 : vector<8x64xf32>
    %c0_34 = arith.constant 0 : index
    %c0_35 = arith.constant 0 : index
    %c2_36 = arith.constant 2 : index
    %c4_37 = arith.constant 4 : index
    %43 = vector.load %arg2[%c0_34, %c0_35, %c2_36, %c4_37] : memref<1x1x10x72xf32, #tpu.memory_space<vmem>>, vector<1x1x8x64xf32>
    %44 = vector.shape_cast %43 : vector<1x1x8x64xf32> to vector<8x64xf32>
    %c7 = arith.constant 7 : index
    %c0_38 = arith.constant 0 : index
    %45 = vector.load %arg3[%c7, %c0_38] : memref<9x64xf32, #tpu.memory_space<vmem>>, vector<1x64xf32>
    %46 = vector.broadcast %45 : vector<1x64xf32> to vector<8x64xf32>
    %47 = arith.mulf %44, %46 : vector<8x64xf32>
    %48 = arith.addf %42, %47 : vector<8x64xf32>
    %c0_39 = arith.constant 0 : index
    %c0_40 = arith.constant 0 : index
    %c2_41 = arith.constant 2 : index
    %c8_42 = arith.constant 8 : index
    %49 = vector.load %arg2[%c0_39, %c0_40, %c2_41, %c8_42] : memref<1x1x10x72xf32, #tpu.memory_space<vmem>>, vector<1x1x8x64xf32>
    %50 = vector.shape_cast %49 : vector<1x1x8x64xf32> to vector<8x64xf32>
    %c8_43 = arith.constant 8 : index
    %c0_44 = arith.constant 0 : index
    %51 = vector.load %arg3[%c8_43, %c0_44] : memref<9x64xf32, #tpu.memory_space<vmem>>, vector<1x64xf32>
    %52 = vector.broadcast %51 : vector<1x64xf32> to vector<8x64xf32>
    %53 = arith.mulf %50, %52 : vector<8x64xf32>
    %54 = arith.addf %48, %53 : vector<8x64xf32>
    %c0_45 = arith.constant 0 : index
    %c0_46 = arith.constant 0 : index
    %55 = vector.load %arg4[%c0_45, %c0_46] : memref<64x128xf32, #tpu.memory_space<vmem>>, vector<64x128xf32>
    %cst_47 = arith.constant dense<0.000000e+00> : vector<8x128xf32>
    %56 = tpu.matmul %54, %55, %cst_47 {dimension_numbers = #tpu.dot_dimension_numbers<[1], [0], [0], [1], [0, 0, 1, 1], [], []>} : vector<8x64xf32>, vector<64x128xf32>, vector<8x128xf32> -> vector<8x128xf32>
    %c0_48 = arith.constant 0 : index
    %c0_49 = arith.constant 0 : index
    %c0_50 = arith.constant 0 : index
    %c0_51 = arith.constant 0 : index
    %57 = vector.load %arg5[%c0_48, %c0_49, %c0_50, %c0_51] : memref<1x1x8x128xf32, #tpu.memory_space<vmem>>, vector<1x1x8x128xf32>
    %58 = vector.shape_cast %57 : vector<1x1x8x128xf32> to vector<8x128xf32>
    %59 = vector.shape_cast %56 : vector<8x128xf32> to vector<1x1x8x128xf32>
    tpu.vector_store %arg5[%c0_48, %c0_49, %c0_50, %c0_51], %59 {strides = array<i32>} : memref<1x1x8x128xf32, #tpu.memory_space<vmem>>, vector<1x1x8x128xf32>,
    return
  }
  func.func @transform_0(%arg0: i32, %arg1: i32) -> (i32, i32, i32, i32) {
    %c0_i32 = arith.constant 0 : i32
    %c0_i32_0 = arith.constant 0 : i32
    %c0_i32_1 = arith.constant 0 : i32
    return %arg0, %arg1, %c0_i32, %c0_i32_0 : i32, i32, i32, i32
  }
  func.func @transform_1(%arg0: i32, %arg1: i32) -> (i32, i32) {
    %c0_i32 = arith.constant 0 : i32
    %c0_i32_0 = arith.constant 0 : i32
    %c0_i32_1 = arith.constant 0 : i32
    return %c0_i32, %c0_i32_0 : i32, i32
  }
  func.func @transform_2(%arg0: i32, %arg1: i32) -> (i32, i32) {
    %c0_i32 = arith.constant 0 : i32
    %c0_i32_0 = arith.constant 0 : i32
    %c0_i32_1 = arith.constant 0 : i32
    return %c0_i32, %c0_i32_0 : i32, i32
  }
  func.func @transform_3(%arg0: i32, %arg1: i32) -> (i32, i32, i32, i32) {
    %c0_i32 = arith.constant 0 : i32
    %c0_i32_0 = arith.constant 0 : i32
    %c0_i32_1 = arith.constant 0 : i32
    return %arg0, %arg1, %c0_i32, %c0_i32_0 : i32, i32, i32, i32
  }
}

</mosaic_0001>

<llo_original>
// kernel: tpu_custom_call.1
$region0: #{tpu_custom_call.1}
  #allocation0 [shape = 'u32[]', space=smem, size = 0x4, offset = 0x4, fixed_abs, tag = 'smem constant byte address 0x4 - core index']
  #allocation1 [shape = 'u32[144,128]{1,0:T(1,128)}', space=vmem, size = 0x12000, scoped, tag = 'internal scratch']
  %s0 = inlined_call_operand.vmem [shape: f32[2,2,10,72], index: 0, kind: input, shape index: {}]
  %s1 = inlined_call_operand.vmem [shape: f32[9,64], index: 1, kind: input, shape index: {}]
  %s2 = inlined_call_operand.vmem [shape: f32[64,128], index: 2, kind: input, shape index: {}]
  %s3 = inlined_call_operand.hbm [shape: f32[2,2,8,128], index: 3, kind: output, shape index: {}]
  %s4 = sld [smem:[#allocation0]]
  $region45: #{tpu_custom_call.1} parent=0
    _
  %s6 = ssub.s32 1, %s4
  %s7 = scalar_select 0, %s6, %s4
  $region1: #{tpu_custom_call.1} parent=0
    #allocation2 [shape = 'u8[8192]{0}', space=vmem, size = 0x2000, scoped, tag = 'output window, operand 0']
    #allocation3 [shape = 's32[2]{0}', space=sflag, size = 0x8, scoped, tag = 'scoped memory for tpu_custom_call.1']
    %8 = vsyncpa [#allocation3], 0
    %s9 = scalar_lea.sflag [#allocation3], 1
    %10 = vsyncpa %s9, 0
    loop: start=0, step=1, limit=6
    $region2: #{tpu_custom_call.1} parent=1 // loop_pre_header
      _
    $region3: #{tpu_custom_call.1} parent=1 // loop_header
      %s12 = sphi 0, %s16
      %p13 = scmp.ge.s32.totalorder %s12, 6
      %s19 = sphi 0, %s31
      %s20 = sphi 0, %s27
      %s21 = sphi 0, %s19
      %s22 = sphi 0, %s20
      %s23 = sphi 0, %s21
      %s24 = sphi 0, %s22
      %s36 = sphi 0, %s38
      %s39 = sphi 0, %s36
      %s40 = sphi 0, %s39
      %s56 = sphi 0, %s40
      %s60 = sphi 0, %s60
      %s62 = sphi 0, %s60
      %s63 = sphi 0, %s62
      %s77 = sphi 0, %s63
      %s81 = sphi 0, %s81
      %s83 = sphi 0, %s81
      %s84 = sphi 0, %s83
      %s98 = sphi 0, %s84
      %s106 = sphi 0, %s108
      %s109 = sphi 0, %s106
      %s110 = sphi 0, %s109
      %s126 = sphi 0, %s110
    $region4: #{tpu_custom_call.1} parent=1 // loop_header_branch
      %15 = sbr.rel (%p13) target = $region8
    $region5: #{tpu_custom_call.1} parent=1 // loop_body
      %s17 = ssub.s32 %s12, 1
      %s18 = ssub.s32 %s12, 2
      %s25 = sadd.s32 1, %s20
      %p26 = scmp.ge.s32.totalorder %s25, 2
      %s27 = scalar_select %p26, 0, %s25
      %s28 = sadd.s32 1, %s19
      %s29 = scalar_select %p26, %s28, %s19
      %p30 = scmp.ge.s32.totalorder %s29, 2
      %s31 = scalar_select %p30, 0, %s29
      %s32 = ssub.s32 %s19, %s31
      %s33 = ssub.s32 %s20, %s27
      %s34 = sor.u32 %s32, %s33
      %p35 = scmp.eq.s32.totalorder %s34, 0
      %s37 = sadd.s32 %s36, 1
      %s38 = scalar_select %p35, %s36, %s37
      %p41 = pneg %p35
      %p42 = scmp.eq.s32.totalorder %s12, 3
      %p43 = por %p41, %p42
      %p44 = scmp.ne.s32.totalorder %s36, %s39
      %p45 = scmp.eq.s32.totalorder %s12, 0
      %p46 = por %p44, %p45
      %p47 = scmp.ne.s32.totalorder %s36, %s39
      %p48 = scmp.eq.s32.totalorder %s17, 3
      %p49 = por %p47, %p48
      %p50 = scmp.ne.s32.totalorder %s39, %s40
      %p51 = scmp.eq.s32.totalorder %s17, 0
      %p52 = por %p50, %p51
      %p53 = scmp.ne.s32.totalorder %s39, %s40
      %p54 = scmp.eq.s32.totalorder %s18, 3
      %p55 = por %p53, %p54
      %p57 = scmp.ne.s32.totalorder %s40, %s56
      %p58 = scmp.eq.s32.totalorder %s18, 0
      %p59 = por %p57, %p58
      %s61 = sadd.s32 %s60, 1
      %p64 = scmp.eq.s32.totalorder %s12, 3
      %p65 = scmp.ne.s32.totalorder %s60, %s62
      %p66 = scmp.eq.s32.totalorder %s12, 0
      %p67 = por %p65, %p66
      %p68 = scmp.ne.s32.totalorder %s60, %s62
      %p69 = scmp.eq.s32.totalorder %s17, 3
      %p70 = por %p68, %p69
      %p71 = scmp.ne.s32.totalorder %s62, %s63
      %p72 = scmp.eq.s32.totalorder %s17, 0
      %p73 = por %p71, %p72
      %p74 = scmp.ne.s32.totalorder %s62, %s63
      %p75 = scmp.eq.s32.totalorder %s18, 3
      %p76 = por %p74, %p75
      %p78 = scmp.ne.s32.totalorder %s63, %s77
      %p79 = scmp.eq.s32.totalorder %s18, 0
      %p80 = por %p78, %p79
      %s82 = sadd.s32 %s81, 1
      %p85 = scmp.eq.s32.totalorder %s12, 3
      %p86 = scmp.ne.s32.totalorder %s81, %s83
      %p87 = scmp.eq.s32.totalorder %s12, 0
      %p88 = por %p86, %p87
      %p89 = scmp.ne.s32.totalorder %s81, %s83
      %p90 = scmp.eq.s32.totalorder %s17, 3
      %p91 = por %p89, %p90
      %p92 = scmp.ne.s32.totalorder %s83, %s84
      %p93 = scmp.eq.s32.totalorder %s17, 0
      %p94 = por %p92, %p93
      %p95 = scmp.ne.s32.totalorder %s83, %s84
      %p96 = scmp.eq.s32.totalorder %s18, 3
      %p97 = por %p95, %p96
      %p99 = scmp.ne.s32.totalorder %s84, %s98
      %p100 = scmp.eq.s32.totalorder %s18, 0
      %p101 = por %p99, %p100
      %s102 = ssub.s32 %s19, %s31
      %s103 = ssub.s32 %s20, %s27
      %s104 = sor.u32 %s102, %s103
      %p105 = scmp.eq.s32.totalorder %s104, 0
      %s107 = sadd.s32 %s106, 1
      %s108 = scalar_select %p105, %s106, %s107
      %p111 = pneg %p105
      %p112 = scmp.eq.s32.totalorder %s12, 3
      %p113 = por %p111, %p112
      %p114 = scmp.ne.s32.totalorder %s106, %s109
      %p115 = scmp.eq.s32.totalorder %s12, 0
      %p116 = por %p114, %p115
      %p117 = scmp.ne.s32.totalorder %s106, %s109
      %p118 = scmp.eq.s32.totalorder %s17, 3
      %p119 = por %p117, %p118
      %p120 = scmp.ne.s32.totalorder %s109, %s110
      %p121 = scmp.eq.s32.totalorder %s17, 0
      %p122 = por %p120, %p121
      %p123 = scmp.ne.s32.totalorder %s109, %s110
      %p124 = scmp.eq.s32.totalorder %s18, 3
      %p125 = por %p123, %p124
      %p127 = scmp.ne.s32.totalorder %s110, %s126
      %p128 = scmp.eq.s32.totalorder %s18, 0
      %p129 = por %p127, %p128
      %p130 = scmp.le.s32.totalorder 1, %s12
      %p131 = scmp.lt.s32.totalorder %s12, 5
      %p132 = pnand %p130, %p131
      %p133 = pneg %p132
      // Predicated region
      $region9: #{tpu_custom_call.1} parent=5 // pred_check
        _
      $region10: #{tpu_custom_call.1} parent=5 // pred_check_branch
        %135 = sbr.rel (%p132) target = $region12
      $region11: #{tpu_custom_call.1} parent=5 // pred_region
        %s136 = ssub.s32 %s12, 1
        // Predicated region
        $region13: #{tpu_custom_call.1} parent=11 // pred_check
          %p137 = pneg %p73
        $region14: #{tpu_custom_call.1} parent=11 // pred_check_branch
          %139 = sbr.rel (%p137) target = $region16
        $region15: #{tpu_custom_call.1} parent=11 // pred_region
          _
        $region16: #{tpu_custom_call.1} parent=11 // pred_fallthru
          _
        // Predicated region
        $region17: #{tpu_custom_call.1} parent=11 // pred_check
          %p140 = pneg %p94
        $region18: #{tpu_custom_call.1} parent=11 // pred_check_branch
          %142 = sbr.rel (%p140) target = $region20
        $region19: #{tpu_custom_call.1} parent=11 // pred_region
          _
        $region20: #{tpu_custom_call.1} parent=11 // pred_fallthru
          _
      $region12: #{tpu_custom_call.1} parent=5 // pred_fallthru
        _
      %p143 = scmp.lt.s32.totalorder %s12, 4
      // Predicated region
      $region21: #{tpu_custom_call.1} parent=5 // pred_check
        %p144 = pneg %p143
      $region22: #{tpu_custom_call.1} parent=5 // pred_check_branch
        %146 = sbr.rel (%p144) target = $region24
      $region23: #{tpu_custom_call.1} parent=5 // pred_region
        // Predicated region
        $region25: #{tpu_custom_call.1} parent=23 // pred_check
          %p147 = pneg %p46
        $region26: #{tpu_custom_call.1} parent=23 // pred_check_branch
          %149 = sbr.rel (%p147) target = $region28
        $region27: #{tpu_custom_call.1} parent=23 // pred_region
          %p150 = scmp.lt.s32.totalorder %s19, 1
          %s151 = scalar_select %p150, %s19, 1
          %p152 = scmp.lt.s32.totalorder %s20, 1
          %s153 = scalar_select %p152, %s20, 1
          %s154 = smul.addr %s153, 2
          %s155 = smul.addr %s151, 4
          %s156 = sadd.s32 %s154, %s155
          %s157 = smul.addr %s156, 8
          %s158 = scalar_lea.vmem %s0, %s157
        $region28: #{tpu_custom_call.1} parent=23 // pred_fallthru
          _
      $region24: #{tpu_custom_call.1} parent=5 // pred_fallthru
        _
      %p159 = scmp.le.s32.totalorder 1, %s12
      %p160 = scmp.lt.s32.totalorder %s12, 5
      %p161 = pnand %p159, %p160
      %p162 = pneg %p161
      // Predicated region
      $region29: #{tpu_custom_call.1} parent=5 // pred_check
        _
      $region30: #{tpu_custom_call.1} parent=5 // pred_check_branch
        %164 = sbr.rel (%p161) target = $region32
      $region31: #{tpu_custom_call.1} parent=5 // pred_region
        %s165 = ssub.s32 %s12, 1
        %p166 = scmp.lt.s32.totalorder %s21, 1
        %s167 = scalar_select %p166, %s21, 1
        %p168 = scmp.lt.s32.totalorder %s22, 1
        %s169 = scalar_select %p168, %s22, 1
        %s170 = smul.addr %s169, 2
        %s171 = smul.addr %s167, 4
        %s172 = sadd.s32 %s170, %s171
        %s173 = smul.addr %s172, 8
        %s174 = scalar_lea.vmem %s0, %s173
        %p175 = pneg %p52
        %p176 = pneg %p49
        %p177 = pneg %p73
        %p178 = pneg %p70
        %p179 = pneg %p94
        %p180 = pneg %p91
        %p181 = pneg %p122
        %p182 = pneg %p119
        %s183 = sand.u32 %s109, 1
        %s184 = scalar_lea.sflag [#allocation3], %s183
        %s185 = sand.u32 %s109, 1
        %s186 = smul.addr %s185, 8
        %s187 = scalar_lea.vmem [#allocation2], %s186
        %p188 = scmp.lt.s32.totalorder %s21, 1
        %s189 = scalar_select %p188, %s21, 1
        %p190 = scmp.lt.s32.totalorder %s22, 1
        %s191 = scalar_select %p190, %s22, 1
        %s192 = smul.addr %s191, 2
        %s193 = smul.addr %s189, 4
        %s194 = sadd.s32 %s192, %s193
        %s195 = smul.addr %s194, 8
        %s196 = scalar_lea.vmem %s0, %s195
        %v197 = vld [vmem:[%s196] sm:$0xff]
        %v198 = vld [vmem:[%s1] sm:$0x1]
        %v199 = vlaneseq
        %v200 = vshrl.u32 %v199, 7
        %v201 = vsub.s32 0, %v200
        %v202 = vrot.slane %v198, %v201
        %v203 = vmul.f32 %v197, %v202
        %v204 = vadd.f32 %v203, 0.0
        %v205 = vld [vmem:[%s1 + $0x1] sm:$0x1]
        %v206 = vlaneseq
        %v207 = vshrl.u32 %v206, 7
        %v208 = vsub.s32 0, %v207
        %v209 = vrot.slane %v205, %v208
        %211 = vrot.lane.b32.xlu0 %v209, 4
        %v212 = vpop.permute.xlu0 %211
        %v214 = vmul.f32 %v197, %v212
        %216 = vrot.lane.b32.xlu0 %v214, 124
        %v217 = vpop.permute.xlu0 %216
        %v219 = vadd.f32 %v204, %v217
        %v220 = vld [vmem:[%s1 + $0x2] sm:$0x1]
        %v221 = vlaneseq
        %v222 = vshrl.u32 %v221, 7
        %v223 = vsub.s32 0, %v222
        %v224 = vrot.slane %v220, %v223
        %226 = vrot.lane.b32.xlu0 %v224, 8
        %v227 = vpop.permute.xlu0 %226
        %v229 = vmul.f32 %v197, %v227
        %231 = vrot.lane.b32.xlu0 %v229, 120
        %v232 = vpop.permute.xlu0 %231
        %v234 = vadd.f32 %v219, %v232
        %v235 = vld [vmem:[%s196 + $0x1] sm:$0xff]
        %v236 = vld [vmem:[%s1 + $0x3] sm:$0x1]
        %v237 = vlaneseq
        %v238 = vshrl.u32 %v237, 7
        %v239 = vsub.s32 0, %v238
        %v240 = vrot.slane %v236, %v239
        %v241 = vmul.f32 %v235, %v240
        %v242 = vadd.f32 %v234, %v241
        %v243 = vld [vmem:[%s1 + $0x4] sm:$0x1]
        %v244 = vlaneseq
        %v245 = vshrl.u32 %v244, 7
        %v246 = vsub.s32 0, %v245
        %v247 = vrot.slane %v243, %v246
        %249 = vrot.lane.b32.xlu0 %v247, 4
        %v250 = vpop.permute.xlu0 %249
        %v252 = vmul.f32 %v235, %v250
        %254 = vrot.lane.b32.xlu0 %v252, 124
        %v255 = vpop.permute.xlu0 %254
        %v257 = vadd.f32 %v242, %v255
        %v258 = vld [vmem:[%s1 + $0x5] sm:$0x1]
        %v259 = vlaneseq
        %v260 = vshrl.u32 %v259, 7
        %v261 = vsub.s32 0, %v260
        %v262 = vrot.slane %v258, %v261
        %264 = vrot.lane.b32.xlu0 %v262, 8
        %v265 = vpop.permute.xlu0 %264
        %v267 = vmul.f32 %v235, %v265
        %269 = vrot.lane.b32.xlu0 %v267, 120
        %v270 = vpop.permute.xlu0 %269
        %v272 = vadd.f32 %v257, %v270
        %v273 = vld [vmem:[%s196 + $0x2] sm:$0xff]
        %v274 = vld [vmem:[%s1 + $0x6] sm:$0x1]
        %v275 = vlaneseq
        %v276 = vshrl.u32 %v275, 7
        %v277 = vsub.s32 0, %v276
        %v278 = vrot.slane %v274, %v277
        %v279 = vmul.f32 %v273, %v278
        %v280 = vadd.f32 %v272, %v279
        %v281 = vld [vmem:[%s1 + $0x7] sm:$0x1]
        %v282 = vlaneseq
        %v283 = vshrl.u32 %v282, 7
        %v284 = vsub.s32 0, %v283
        %v285 = vrot.slane %v281, %v284
        %287 = vrot.lane.b32.xlu0 %v285, 4
        %v288 = vpop.permute.xlu0 %287
        %v290 = vmul.f32 %v273, %v288
        %292 = vrot.lane.b32.xlu0 %v290, 124
        %v293 = vpop.permute.xlu0 %292
        %v295 = vadd.f32 %v280, %v293
        %v296 = vld [vmem:[%s1 + $0x8] sm:$0x1]
        %v297 = vlaneseq
        %v298 = vshrl.u32 %v297, 7
        %v299 = vsub.s32 0, %v298
        %v300 = vrot.slane %v296, %v299
        %302 = vrot.lane.b32.xlu0 %v300, 8
        %v303 = vpop.permute.xlu0 %302
        %v305 = vmul.f32 %v273, %v303
        %307 = vrot.lane.b32.xlu0 %v305, 120
        %v308 = vpop.permute.xlu0 %307
        %v310 = vadd.f32 %v295, %v308
        %v311 = vld [vmem:[%s2] sm:$0xff]
        %v312 = vld [vmem:[%s2 + $0x8] sm:$0xff]
        %v313 = vld [vmem:[%s2 + $0x10] sm:$0xff]
        %v314 = vld [vmem:[%s2 + $0x18] sm:$0xff]
        %v315 = vld [vmem:[%s2 + $0x20] sm:$0xff]
        %v316 = vld [vmem:[%s2 + $0x28] sm:$0xff]
        %v317 = vld [vmem:[%s2 + $0x30] sm:$0xff]
        %v318 = vld [vmem:[%s2 + $0x38] sm:$0xff]
        %vm319 = vcmask 523264
        %v321 = vsel %vm319, %v310, 0
        %323 = vmatprep.subr.mxu0 0.0
        %324 = vmatpush1.msra.mxu0 %v311
        %325 = vmatprep.subr.mxu0 0.0
        %326 = vmatpush1.msra.mxu0 %v312
        %327 = vmatprep.subr.mxu0 0.0
        %328 = vmatpush1.msra.mxu0 %v313
        %329 = vmatprep.subr.mxu0 0.0
        %330 = vmatpush1.msra.mxu0 %v314
        %331 = vmatprep.subr.mxu0 0.0
        %332 = vmatpush1.msra.mxu0 %v315
        %333 = vmatprep.subr.mxu0 0.0
        %334 = vmatpush1.msra.mxu0 %v316
        %335 = vmatprep.subr.mxu0 0.0
        %336 = vmatpush1.msra.mxu0 %v317
        %337 = vmatprep.subr.mxu0 0.0
        %338 = vmatpush1.msra.mxu0 %v318
        %339 = vmatprep.subr.mxu0 0.0
        %340 = vmatpush1.msra.mxu0 0.0
        %341 = vmatprep.subr.mxu0 0.0
        %342 = vmatpush1.msra.mxu0 0.0
        %343 = vmatprep.subr.mxu0 0.0
        %344 = vmatpush1.msra.mxu0 0.0
        %345 = vmatprep.subr.mxu0 0.0
        %346 = vmatpush1.msra.mxu0 0.0
        %347 = vmatprep.subr.mxu0 0.0
        %348 = vmatpush1.msra.mxu0 0.0
        %349 = vmatprep.subr.mxu0 0.0
        %350 = vmatpush1.msra.mxu0 0.0
        %351 = vmatprep.subr.mxu0 0.0
        %352 = vmatpush1.msra.mxu0 0.0
        %353 = vmatprep.subr.mxu0 0.0
        %354 = vmatpush1.msra.mxu0 0.0
        %355 = vmatprep.subr.mxu0 0.0
        %356 = vmatpush1.msra.mxu0 0.0
        %357 = vmatprep.subr.mxu0 0.0
        %358 = vmatpush1.msra.mxu0 0.0
        %359 = vmatprep.subr.mxu0 0.0
        %360 = vmatpush1.msra.mxu0 0.0
        %361 = vmatprep.subr.mxu0 0.0
        %362 = vmatpush1.msra.mxu0 0.0
        %363 = vmatprep.subr.mxu0 0.0
        %364 = vmatpush1.msra.mxu0 0.0
        %365 = vmatprep.subr.mxu0 0.0
        %366 = vmatpush1.msra.mxu0 0.0
        %367 = vmatprep.subr.mxu0 0.0
        %368 = vmatpush1.msra.mxu0 0.0
        %369 = vmatprep.subr.mxu0 0.0
        %370 = vmatpush1.msra.mxu0 0.0
        %371 = vmatprep.subr.mxu0 0.0
        %372 = vmatpush1.msra.mxu0 0.0
        %373 = vmatprep.subr.mxu0 0.0
        %374 = vmatpush1.msra.mxu0 0.0
        %375 = vmatprep.subr.mxu0 0.0
        %376 = vmatpush1.msra.mxu0 0.0
        %377 = vmatprep.subr.mxu0 0.0
        %378 = vmatpush1.msra.mxu0 0.0
        %379 = vmatprep.subr.mxu0 0.0
        %380 = vmatpush1.msra.mxu0 0.0
        %381 = vmatprep.subr.mxu0 0.0
        %382 = vmatpush1.msra.mxu0 0.0
        %383 = vmatprep.subr.mxu0 0.0
        %384 = vmatpush1.msra.mxu0 0.0
        %385 = vmatprep.subr.mxu0 0.0
        %386 = vmatpush1.msra.mxu0 0.0
        %387 = vmatprep.mubr.f32.mxu0 0.0
        %388 = vmatmul.mubr.f32.gmra.mrb[0].mxu0 %v321
        %v389 = vpop.f32.mrb[0].mxu0
        %v390 = vadd.f32 0.0, %v389
        %v391 = vpop.f32.mrb[0].mxu0
        %392 = vdwg.mxu0
        %393 = vst [vmem:[%s187] sm:$0xff] %v390
        %s394 = sand.u32 %s109, 1
        %s395 = scalar_lea.sflag [#allocation3], %s394
        %s396 = sand.u32 %s109, 1
        %s397 = smul.addr %s396, 8
        %s398 = scalar_lea.vmem [#allocation2], %s397
        // Predicated region
        $region33: #{tpu_custom_call.1} parent=31 // pred_check
          %p399 = pneg %p119
        $region34: #{tpu_custom_call.1} parent=31 // pred_check_branch
          %401 = sbr.rel (%p399) target = $region36
        $region35: #{tpu_custom_call.1} parent=31 // pred_region
          %s403 = ssub.s32 128, 128
          %404 = vsyncadd %s395, %s403
          %s405 = smul.addr %s21, 2
          %s406 = sadd.s32 %s22, %s405
          %s407 = smul.addr %s406, 128
          %s408 = scalar_lea.hbm %s3, %s407
          %s410 = sshll.u32 %s398, 4
          %s411 = int_to_ptr.vmem [resolvable:$true] %s410
          %413 = dma.vmem_to_hbm [thread:$0]  %s411, 128, %s408, %s395
        $region36: #{tpu_custom_call.1} parent=31 // pred_fallthru
          _
      $region32: #{tpu_custom_call.1} parent=5 // pred_fallthru
        _
      %p414 = scmp.le.s32.totalorder 2, %s12
      // Predicated region
      $region37: #{tpu_custom_call.1} parent=5 // pred_check
        %p415 = pneg %p414
      $region38: #{tpu_custom_call.1} parent=5 // pred_check_branch
        %417 = sbr.rel (%p415) target = $region40
      $region39: #{tpu_custom_call.1} parent=5 // pred_region
        %s418 = ssub.s32 %s12, 2
        // Predicated region
        $region41: #{tpu_custom_call.1} parent=39 // pred_check
          %p419 = pneg %p125
        $region42: #{tpu_custom_call.1} parent=39 // pred_check_branch
          %421 = sbr.rel (%p419) target = $region44
        $region43: #{tpu_custom_call.1} parent=39 // pred_region
          %s422 = sand.u32 %s110, 1
          %s423 = scalar_lea.sflag [#allocation3], %s422
          %s424 = sand.u32 %s110, 1
          %s425 = smul.addr %s424, 8
          %s426 = scalar_lea.vmem [#allocation2], %s425
          %427 = dma.done %s423, 128
        $region44: #{tpu_custom_call.1} parent=39 // pred_fallthru
          _
      $region40: #{tpu_custom_call.1} parent=5 // pred_fallthru
        _
    $region6: #{tpu_custom_call.1} parent=1 // loop_footer
      %s16 = sadd.s32 1, %s12
    $region7: #{tpu_custom_call.1} parent=1 // loop_footer_branch
      %11 = sbr.rel target = $region3
    $region8: #{tpu_custom_call.1} parent=1 // loop_exit
      _
    %428 = vsyncpa [#allocation3], 1
    %s429 = scalar_lea.sflag [#allocation3], 1
    %430 = vsyncpa %s429, 1

</llo_original>
